<compile_context>
chip_gen: v7x
topology: tpu7x:2x2x1
jax: 0.10.0
libtpu: 0.0.40
codegen_flags: <defaults>
</compile_context>

<pallas_src>
import jax
import jax.numpy as jnp
from jax.experimental import pallas as pl
from jax.experimental.pallas import tpu as pltpu


_LANE_CHUNK = 1024   # in-kernel lane sub-chunk (bounds vreg pressure)
_MAX_TB = 8192       # hard cap on the per-step batch tile (lanes)


def _round_up(v, m):
    return ((v + m - 1) // m) * m


def _round_down(v, m):
    return (v // m) * m


def _vmem_capacity_bytes():
    try:
        return int(pltpu.get_tpu_info().vmem_capacity_bytes)
    except Exception:
        return 64 * 1024 * 1024   # conservative fallback (v7x per-TC VMEM)


def _pick_batch_tile(batch, per_lane_bytes):
    """Choose the batch tile TB (multiple of 128 lanes) and the VMEM capacity."""
    vmem_cap = _vmem_capacity_bytes()
    budget = min(vmem_cap // 2, 48 * 1024 * 1024)   # double-buffered working set
    tb_cap = max(128, _round_down(budget // max(per_lane_bytes, 1), 128))
    # TODO(synk): for very large n_states even an (N, N, 128) tile can exceed the
    # budget; a second grid axis over output rows would be needed in that regime.
    b_aligned = _round_up(batch, 128)
    tb = min(tb_cap, _MAX_TB, b_aligned)
    if b_aligned >= 256:
        # Keep >=2 grid steps so both v7x TensorCores get work (no-op for 1-TC chips).
        tb = min(tb, max(128, _round_down(b_aligned // 2, 128)))
    if tb > _LANE_CHUNK:
        tb = _round_down(tb, _LANE_CHUNK)   # even in-kernel lane chunks
    return max(tb, 128), vmem_cap


def _dynsys_kernel(x_ref, u_ref, a_ref, b_ref, c_ref, out_ref):
    # Per-grid-step views (TB batch elements in the lane dimension):
    #   x_ref: (N, TB), u_ref: (M, TB)
    #   a_ref: (N, N, TB)  [j, i, b],  b_ref: (M, N, TB)  [j, i, b],
    #   c_ref: (N, P, TB)  [j, p, b]
    #   out_ref: (N + P, TB)   rows [0, N) = dx, rows [N, N+P) = y
    n_states = a_ref.shape[1]
    n_inputs = b_ref.shape[0]
    n_outputs = c_ref.shape[1]
    tb = x_ref.shape[-1]
    tl = min(tb, _LANE_CHUNK)
    f32 = jnp.float32

    for c in range(tb // tl):          # static (unrolled) lane-chunk loop
        sl = pl.ds(c * tl, tl)
        x = x_ref[:, sl].astype(f32)   # (N, tl)
        u = u_ref[:, sl].astype(f32)   # (M, tl)

        # dx[i, :] = sum_j A[j, i, :] * x[j, :] + sum_j B[j, i, :] * u[j, :]
        dx = a_ref[0, :, sl].astype(f32) * x[0:1, :]
        for j in range(1, n_states):
            dx = dx + a_ref[j, :, sl].astype(f32) * x[j:j + 1, :]
        for j in range(n_inputs):
            dx = dx + b_ref[j, :, sl].astype(f32) * u[j:j + 1, :]

        # y[p, :] = sum_j C[j, p, :] * x[j, :]
        y = c_ref[0, :, sl].astype(f32) * x[0:1, :]
        for j in range(1, n_states):
            y = y + c_ref[j, :, sl].astype(f32) * x[j:j + 1, :]

        out_ref[0:n_states, sl] = dx.astype(out_ref.dtype)
        out_ref[n_states:n_states + n_outputs, sl] = y.astype(out_ref.dtype)


@jax.jit
def dynamical_system_var_forward(x, u, a_bm, b_bm, c_bm):
    """Pallas implementation of DynamicalSystemVar.forward.

    Args:
      x:    (B, n_states)
      u:    (B, n_inputs)
      a_bm: (n_states,  n_states,  B)  with a_bm[j, i, b] = mat_a[b, i, j]
      b_bm: (n_inputs,  n_states,  B)  with b_bm[j, i, b] = mat_b[b, i, j]
      c_bm: (n_states,  n_outputs, B)  with c_bm[j, p, b] = mat_c[b, p, j]
    Returns:
      (dx, y): (B, n_states), (B, n_outputs)
    """
    B, N = x.shape
    M = u.shape[1]
    P = c_bm.shape[1]
    out_dtype = x.dtype
    isz = jnp.dtype(x.dtype).itemsize
    o_isz = jnp.dtype(out_dtype).itemsize

    # Per-lane VMEM footprint: double-buffered DMA blocks + f32 in-kernel working set.
    per_lane = (2 * (isz * (N * N + M * N + N * P + N + M) + o_isz * (N + P))
                + 4 * (3 * N + 2 * M + 2 * P))
    TB, vmem_cap = _pick_batch_tile(B, per_lane)
    grid = (pl.cdiv(B, TB),)

    # x / u are tiny relative to A/B/C: transposing them is the only relayout.
    xT = jnp.transpose(x, (1, 0))      # (N, B)
    uT = jnp.transpose(u, (1, 0))      # (M, B)

    in_specs = [
        pl.BlockSpec((N, TB), lambda g: (0, g)),          # x (batch in lanes)
        pl.BlockSpec((M, TB), lambda g: (0, g)),          # u
        pl.BlockSpec((N, N, TB), lambda g: (0, 0, g)),    # A  [j, i, b]
        pl.BlockSpec((M, N, TB), lambda g: (0, 0, g)),    # B  [j, i, b]
        pl.BlockSpec((N, P, TB), lambda g: (0, 0, g)),    # C  [j, p, b]
    ]
    out_spec = pl.BlockSpec((N + P, TB), lambda g: (0, g))   # packed [dx; y]
    out_shape = jax.ShapeDtypeStruct((N + P, B), out_dtype)

    cost = pl.CostEstimate(
        flops=2 * B * (N * N + M * N + P * N),
        transcendentals=0,
        bytes_accessed=isz * B * (N * N + M * N + P * N + N + M)
                       + o_isz * B * (N + P),
    )

    packed = pl.pallas_call(
        _dynsys_kernel,
        grid=grid,
        in_specs=in_specs,
        out_specs=out_spec,
        out_shape=out_shape,
        compiler_params=pltpu.CompilerParams(
            dimension_semantics=("parallel",),
            vmem_limit_bytes=int(min(vmem_cap * 3 // 4, 96 * 1024 * 1024)),
        ),
        cost_estimate=cost,
    )(xT, uT, a_bm, b_bm, c_bm)

    dx = jnp.transpose(packed[:N, :], (1, 0))   # (B, N)
    y = jnp.transpose(packed[N:, :], (1, 0))    # (B, P)
    return dx, y


def dynamical_system_var_forward_batch_major(x, u, mat_a, mat_b, mat_c):
    """Adapter from the PyTorch (batch-major) parameter layout.

    NOTE: these transposes cost an extra HBM read+write pass over A/B/C; prefer
    emitting the parameters batch-minor at reset() time and calling
    `dynamical_system_var_forward` directly.
    """
    return dynamical_system_var_forward(
        x, u,
        jnp.transpose(mat_a, (2, 1, 0)),
        jnp.transpose(mat_b, (2, 1, 0)),
        jnp.transpose(mat_c, (2, 1, 0)),
    )


if __name__ == "__main__":
    # Small shapes consistent with the module's forward.
    batch_size = 4
    n_states = 8
    n_inputs = 4
    n_outputs = 2
    dtype = jnp.float32

    key = jax.random.PRNGKey(0)
    k = jax.random.split(key, 8)

    # Deterministic "initial" system matrices and variance scales.
    initial_mat_a = jax.random.normal(k[0], (n_states, n_states), dtype) * 0.1
    initial_mat_b = jax.random.normal(k[1], (n_states, n_inputs), dtype) * 0.1
    initial_mat_c = jax.random.normal(k[2], (n_outputs, n_states), dtype) * 0.1
    var_a = jnp.float32(0.01)
    var_b = jnp.float32(0.01)
    var_c = jnp.float32(0.01)

    # reset(): the producer emits the per-batch perturbed parameters directly in
    # batch-minor (reduction-major) layout -- no HBM relayout pass before the kernel.
    a_bm = initial_mat_a.T[:, :, None] + var_a * jax.random.normal(
        k[3], (n_states, n_states, batch_size), dtype)
    b_bm = initial_mat_b.T[:, :, None] + var_b * jax.random.normal(
        k[4], (n_inputs, n_states, batch_size), dtype)
    c_bm = initial_mat_c.T[:, :, None] + var_c * jax.random.normal(
        k[5], (n_states, n_outputs, batch_size), dtype)

    # Example inputs (PyTorch layout).
    x = jax.random.normal(k[6], (batch_size, n_states), dtype)
    u = jax.random.normal(k[7], (batch_size, n_inputs), dtype)

    dx, y = dynamical_system_var_forward(x, u, a_bm, b_bm, c_bm)
    dx = jax.block_until_ready(dx)
    y = jax.block_until_ready(y)

    # Pure-JAX reference in the PyTorch (batch-major) layout / bmm semantics.
    mat_a = jnp.transpose(a_bm, (2, 1, 0))   # (B, i, j)
    mat_b = jnp.transpose(b_bm, (2, 1, 0))
    mat_c = jnp.transpose(c_bm, (2, 1, 0))
    dx_ref = jnp.einsum("bij,bj->bi", mat_a, x) + jnp.einsum("bij,bj->bi", mat_b, u)
    y_ref = jnp.einsum("bij,bj->bi", mat_c, x)

    assert dx.shape == (batch_size, n_states)
    assert y.shape == (batch_size, n_outputs)
    assert jnp.allclose(dx, dx_ref, atol=1e-5, rtol=1e-5)
    assert jnp.allclose(y, y_ref, atol=1e-5, rtol=1e-5)

    # Also exercise the batch-major adapter (interface-compatible path).
    dx2, y2 = dynamical_system_var_forward_batch_major(x, u, mat_a, mat_b, mat_c)
    dx2 = jax.block_until_ready(dx2)
    y2 = jax.block_until_ready(y2)
    assert jnp.allclose(dx2, dx_ref, atol=1e-5, rtol=1e-5)
    assert jnp.allclose(y2, y_ref, atol=1e-5, rtol=1e-5)

    print("KERNEL_OK")
</pallas_src>

<mosaic_0001>
module attributes {stable_mosaic.version = 11 : i64} {
  func.func @_dynsys_kernel(%arg0: i32, %arg1: memref<8x128xf32, #tpu.memory_space<vmem>>, %arg2: memref<4x128xf32, #tpu.memory_space<vmem>>, %arg3: memref<8x8x128xf32, #tpu.memory_space<vmem>>, %arg4: memref<4x8x128xf32, #tpu.memory_space<vmem>>, %arg5: memref<8x2x128xf32, #tpu.memory_space<vmem>>, %arg6: memref<10x128xf32, #tpu.memory_space<vmem>>) attributes {dimension_semantics = [#tpu.dimension_semantics<parallel>], iteration_bounds = array<i64: 1>, scalar_prefetch = 0 : i64, scratch_operands = 0 : i64, tpu.core_type = #tpu.core_type<tc>, window_params = [{transform_indices = @transform_0, window_bounds = array<i64: 8, 128>}, {transform_indices = @transform_1, window_bounds = array<i64: 4, 128>}, {transform_indices = @transform_2, window_bounds = array<i64: 8, 8, 128>}, {transform_indices = @transform_3, window_bounds = array<i64: 4, 8, 128>}, {transform_indices = @transform_4, window_bounds = array<i64: 8, 2, 128>}, {transform_indices = @transform_5, window_bounds = array<i64: 10, 128>}]} {
    %c0 = arith.constant 0 : index
    %c0_0 = arith.constant 0 : index
    %0 = vector.load %arg1[%c0, %c0_0] : memref<8x128xf32, #tpu.memory_space<vmem>>, vector<8x128xf32>
    %c0_1 = arith.constant 0 : index
    %c0_2 = arith.constant 0 : index
    %1 = vector.load %arg2[%c0_1, %c0_2] : memref<4x128xf32, #tpu.memory_space<vmem>>, vector<4x128xf32>
    %c0_3 = arith.constant 0 : index
    %c0_4 = arith.constant 0 : index
    %c0_5 = arith.constant 0 : index
    %2 = vector.load %arg3[%c0_3, %c0_4, %c0_5] : memref<8x8x128xf32, #tpu.memory_space<vmem>>, vector<1x8x128xf32>
    %3 = vector.shape_cast %2 : vector<1x8x128xf32> to vector<8x128xf32>
    %4 = vector.extract_strided_slice %0 {offsets = [0, 0], sizes = [1, 128], strides = [1, 1]} : vector<8x128xf32> to vector<1x128xf32>
    %5 = vector.broadcast %4 : vector<1x128xf32> to vector<8x128xf32>
    %6 = arith.mulf %3, %5 : vector<8x128xf32>
    %c1 = arith.constant 1 : index
    %c0_6 = arith.constant 0 : index
    %c0_7 = arith.constant 0 : index
    %7 = vector.load %arg3[%c1, %c0_6, %c0_7] : memref<8x8x128xf32, #tpu.memory_space<vmem>>, vector<1x8x128xf32>
    %8 = vector.shape_cast %7 : vector<1x8x128xf32> to vector<8x128xf32>
    %9 = vector.extract_strided_slice %0 {offsets = [1, 0], sizes = [1, 128], strides = [1, 1]} : vector<8x128xf32> to vector<1x128xf32>
    %10 = vector.broadcast %9 : vector<1x128xf32> to vector<8x128xf32>
    %11 = arith.mulf %8, %10 : vector<8x128xf32>
    %12 = arith.addf %6, %11 : vector<8x128xf32>
    %c2 = arith.constant 2 : index
    %c0_8 = arith.constant 0 : index
    %c0_9 = arith.constant 0 : index
    %13 = vector.load %arg3[%c2, %c0_8, %c0_9] : memref<8x8x128xf32, #tpu.memory_space<vmem>>, vector<1x8x128xf32>
    %14 = vector.shape_cast %13 : vector<1x8x128xf32> to vector<8x128xf32>
    %15 = vector.extract_strided_slice %0 {offsets = [2, 0], sizes = [1, 128], strides = [1, 1]} : vector<8x128xf32> to vector<1x128xf32>
    %16 = vector.broadcast %15 : vector<1x128xf32> to vector<8x128xf32>
    %17 = arith.mulf %14, %16 : vector<8x128xf32>
    %18 = arith.addf %12, %17 : vector<8x128xf32>
    %c3 = arith.constant 3 : index
    %c0_10 = arith.constant 0 : index
    %c0_11 = arith.constant 0 : index
    %19 = vector.load %arg3[%c3, %c0_10, %c0_11] : memref<8x8x128xf32, #tpu.memory_space<vmem>>, vector<1x8x128xf32>
    %20 = vector.shape_cast %19 : vector<1x8x128xf32> to vector<8x128xf32>
    %21 = vector.extract_strided_slice %0 {offsets = [3, 0], sizes = [1, 128], strides = [1, 1]} : vector<8x128xf32> to vector<1x128xf32>
    %22 = vector.broadcast %21 : vector<1x128xf32> to vector<8x128xf32>
    %23 = arith.mulf %20, %22 : vector<8x128xf32>
    %24 = arith.addf %18, %23 : vector<8x128xf32>
    %c4 = arith.constant 4 : index
    %c0_12 = arith.constant 0 : index
    %c0_13 = arith.constant 0 : index
    %25 = vector.load %arg3[%c4, %c0_12, %c0_13] : memref<8x8x128xf32, #tpu.memory_space<vmem>>, vector<1x8x128xf32>
    %26 = vector.shape_cast %25 : vector<1x8x128xf32> to vector<8x128xf32>
    %27 = vector.extract_strided_slice %0 {offsets = [4, 0], sizes = [1, 128], strides = [1, 1]} : vector<8x128xf32> to vector<1x128xf32>
    %28 = vector.broadcast %27 : vector<1x128xf32> to vector<8x128xf32>
    %29 = arith.mulf %26, %28 : vector<8x128xf32>
    %30 = arith.addf %24, %29 : vector<8x128xf32>
    %c5 = arith.constant 5 : index
    %c0_14 = arith.constant 0 : index
    %c0_15 = arith.constant 0 : index
    %31 = vector.load %arg3[%c5, %c0_14, %c0_15] : memref<8x8x128xf32, #tpu.memory_space<vmem>>, vector<1x8x128xf32>
    %32 = vector.shape_cast %31 : vector<1x8x128xf32> to vector<8x128xf32>
    %33 = vector.extract_strided_slice %0 {offsets = [5, 0], sizes = [1, 128], strides = [1, 1]} : vector<8x128xf32> to vector<1x128xf32>
    %34 = vector.broadcast %33 : vector<1x128xf32> to vector<8x128xf32>
    %35 = arith.mulf %32, %34 : vector<8x128xf32>
    %36 = arith.addf %30, %35 : vector<8x128xf32>
    %c6 = arith.constant 6 : index
    %c0_16 = arith.constant 0 : index
    %c0_17 = arith.constant 0 : index
    %37 = vector.load %arg3[%c6, %c0_16, %c0_17] : memref<8x8x128xf32, #tpu.memory_space<vmem>>, vector<1x8x128xf32>
    %38 = vector.shape_cast %37 : vector<1x8x128xf32> to vector<8x128xf32>
    %39 = vector.extract_strided_slice %0 {offsets = [6, 0], sizes = [1, 128], strides = [1, 1]} : vector<8x128xf32> to vector<1x128xf32>
    %40 = vector.broadcast %39 : vector<1x128xf32> to vector<8x128xf32>
    %41 = arith.mulf %38, %40 : vector<8x128xf32>
    %42 = arith.addf %36, %41 : vector<8x128xf32>
    %c7 = arith.constant 7 : index
    %c0_18 = arith.constant 0 : index
    %c0_19 = arith.constant 0 : index
    %43 = vector.load %arg3[%c7, %c0_18, %c0_19] : memref<8x8x128xf32, #tpu.memory_space<vmem>>, vector<1x8x128xf32>
    %44 = vector.shape_cast %43 : vector<1x8x128xf32> to vector<8x128xf32>
    %45 = vector.extract_strided_slice %0 {offsets = [7, 0], sizes = [1, 128], strides = [1, 1]} : vector<8x128xf32> to vector<1x128xf32>
    %46 = vector.broadcast %45 : vector<1x128xf32> to vector<8x128xf32>
    %47 = arith.mulf %44, %46 : vector<8x128xf32>
    %48 = arith.addf %42, %47 : vector<8x128xf32>
    %c0_20 = arith.constant 0 : index
    %c0_21 = arith.constant 0 : index
    %c0_22 = arith.constant 0 : index
    %49 = vector.load %arg4[%c0_20, %c0_21, %c0_22] : memref<4x8x128xf32, #tpu.memory_space<vmem>>, vector<1x8x128xf32>
    %50 = vector.shape_cast %49 : vector<1x8x128xf32> to vector<8x128xf32>
    %51 = vector.extract_strided_slice %1 {offsets = [0, 0], sizes = [1, 128], strides = [1, 1]} : vector<4x128xf32> to vector<1x128xf32>
    %52 = vector.broadcast %51 : vector<1x128xf32> to vector<8x128xf32>
    %53 = arith.mulf %50, %52 : vector<8x128xf32>
    %54 = arith.addf %48, %53 : vector<8x128xf32>
    %c1_23 = arith.constant 1 : index
    %c0_24 = arith.constant 0 : index
    %c0_25 = arith.constant 0 : index
    %55 = vector.load %arg4[%c1_23, %c0_24, %c0_25] : memref<4x8x128xf32, #tpu.memory_space<vmem>>, vector<1x8x128xf32>
    %56 = vector.shape_cast %55 : vector<1x8x128xf32> to vector<8x128xf32>
    %57 = vector.extract_strided_slice %1 {offsets = [1, 0], sizes = [1, 128], strides = [1, 1]} : vector<4x128xf32> to vector<1x128xf32>
    %58 = vector.broadcast %57 : vector<1x128xf32> to vector<8x128xf32>
    %59 = arith.mulf %56, %58 : vector<8x128xf32>
    %60 = arith.addf %54, %59 : vector<8x128xf32>
    %c2_26 = arith.constant 2 : index
    %c0_27 = arith.constant 0 : index
    %c0_28 = arith.constant 0 : index
    %61 = vector.load %arg4[%c2_26, %c0_27, %c0_28] : memref<4x8x128xf32, #tpu.memory_space<vmem>>, vector<1x8x128xf32>
    %62 = vector.shape_cast %61 : vector<1x8x128xf32> to vector<8x128xf32>
    %63 = vector.extract_strided_slice %1 {offsets = [2, 0], sizes = [1, 128], strides = [1, 1]} : vector<4x128xf32> to vector<1x128xf32>
    %64 = vector.broadcast %63 : vector<1x128xf32> to vector<8x128xf32>
    %65 = arith.mulf %62, %64 : vector<8x128xf32>
    %66 = arith.addf %60, %65 : vector<8x128xf32>
    %c3_29 = arith.constant 3 : index
    %c0_30 = arith.constant 0 : index
    %c0_31 = arith.constant 0 : index
    %67 = vector.load %arg4[%c3_29, %c0_30, %c0_31] : memref<4x8x128xf32, #tpu.memory_space<vmem>>, vector<1x8x128xf32>
    %68 = vector.shape_cast %67 : vector<1x8x128xf32> to vector<8x128xf32>
    %69 = vector.extract_strided_slice %1 {offsets = [3, 0], sizes = [1, 128], strides = [1, 1]} : vector<4x128xf32> to vector<1x128xf32>
    %70 = vector.broadcast %69 : vector<1x128xf32> to vector<8x128xf32>
    %71 = arith.mulf %68, %70 : vector<8x128xf32>
    %72 = arith.addf %66, %71 : vector<8x128xf32>
    %c0_32 = arith.constant 0 : index
    %c0_33 = arith.constant 0 : index
    %c0_34 = arith.constant 0 : index
    %73 = vector.load %arg5[%c0_32, %c0_33, %c0_34] : memref<8x2x128xf32, #tpu.memory_space<vmem>>, vector<1x2x128xf32>
    %74 = vector.shape_cast %73 : vector<1x2x128xf32> to vector<2x128xf32>
    %75 = vector.extract_strided_slice %0 {offsets = [0, 0], sizes = [1, 128], strides = [1, 1]} : vector<8x128xf32> to vector<1x128xf32>
    %76 = vector.broadcast %75 : vector<1x128xf32> to vector<2x128xf32>
    %77 = arith.mulf %74, %76 : vector<2x128xf32>
    %c1_35 = arith.constant 1 : index
    %c0_36 = arith.constant 0 : index
    %c0_37 = arith.constant 0 : index
    %78 = vector.load %arg5[%c1_35, %c0_36, %c0_37] : memref<8x2x128xf32, #tpu.memory_space<vmem>>, vector<1x2x128xf32>
    %79 = vector.shape_cast %78 : vector<1x2x128xf32> to vector<2x128xf32>
    %80 = vector.extract_strided_slice %0 {offsets = [1, 0], sizes = [1, 128], strides = [1, 1]} : vector<8x128xf32> to vector<1x128xf32>
    %81 = vector.broadcast %80 : vector<1x128xf32> to vector<2x128xf32>
    %82 = arith.mulf %79, %81 : vector<2x128xf32>
    %83 = arith.addf %77, %82 : vector<2x128xf32>
    %c2_38 = arith.constant 2 : index
    %c0_39 = arith.constant 0 : index
    %c0_40 = arith.constant 0 : index
    %84 = vector.load %arg5[%c2_38, %c0_39, %c0_40] : memref<8x2x128xf32, #tpu.memory_space<vmem>>, vector<1x2x128xf32>
    %85 = vector.shape_cast %84 : vector<1x2x128xf32> to vector<2x128xf32>
    %86 = vector.extract_strided_slice %0 {offsets = [2, 0], sizes = [1, 128], strides = [1, 1]} : vector<8x128xf32> to vector<1x128xf32>
    %87 = vector.broadcast %86 : vector<1x128xf32> to vector<2x128xf32>
    %88 = arith.mulf %85, %87 : vector<2x128xf32>
    %89 = arith.addf %83, %88 : vector<2x128xf32>
    %c3_41 = arith.constant 3 : index
    %c0_42 = arith.constant 0 : index
    %c0_43 = arith.constant 0 : index
    %90 = vector.load %arg5[%c3_41, %c0_42, %c0_43] : memref<8x2x128xf32, #tpu.memory_space<vmem>>, vector<1x2x128xf32>
    %91 = vector.shape_cast %90 : vector<1x2x128xf32> to vector<2x128xf32>
    %92 = vector.extract_strided_slice %0 {offsets = [3, 0], sizes = [1, 128], strides = [1, 1]} : vector<8x128xf32> to vector<1x128xf32>
    %93 = vector.broadcast %92 : vector<1x128xf32> to vector<2x128xf32>
    %94 = arith.mulf %91, %93 : vector<2x128xf32>
    %95 = arith.addf %89, %94 : vector<2x128xf32>
    %c4_44 = arith.constant 4 : index
    %c0_45 = arith.constant 0 : index
    %c0_46 = arith.constant 0 : index
    %96 = vector.load %arg5[%c4_44, %c0_45, %c0_46] : memref<8x2x128xf32, #tpu.memory_space<vmem>>, vector<1x2x128xf32>
    %97 = vector.shape_cast %96 : vector<1x2x128xf32> to vector<2x128xf32>
    %98 = vector.extract_strided_slice %0 {offsets = [4, 0], sizes = [1, 128], strides = [1, 1]} : vector<8x128xf32> to vector<1x128xf32>
    %99 = vector.broadcast %98 : vector<1x128xf32> to vector<2x128xf32>
    %100 = arith.mulf %97, %99 : vector<2x128xf32>
    %101 = arith.addf %95, %100 : vector<2x128xf32>
    %c5_47 = arith.constant 5 : index
    %c0_48 = arith.constant 0 : index
    %c0_49 = arith.constant 0 : index
    %102 = vector.load %arg5[%c5_47, %c0_48, %c0_49] : memref<8x2x128xf32, #tpu.memory_space<vmem>>, vector<1x2x128xf32>
    %103 = vector.shape_cast %102 : vector<1x2x128xf32> to vector<2x128xf32>
    %104 = vector.extract_strided_slice %0 {offsets = [5, 0], sizes = [1, 128], strides = [1, 1]} : vector<8x128xf32> to vector<1x128xf32>
    %105 = vector.broadcast %104 : vector<1x128xf32> to vector<2x128xf32>
    %106 = arith.mulf %103, %105 : vector<2x128xf32>
    %107 = arith.addf %101, %106 : vector<2x128xf32>
    %c6_50 = arith.constant 6 : index
    %c0_51 = arith.constant 0 : index
    %c0_52 = arith.constant 0 : index
    %108 = vector.load %arg5[%c6_50, %c0_51, %c0_52] : memref<8x2x128xf32, #tpu.memory_space<vmem>>, vector<1x2x128xf32>
    %109 = vector.shape_cast %108 : vector<1x2x128xf32> to vector<2x128xf32>
    %110 = vector.extract_strided_slice %0 {offsets = [6, 0], sizes = [1, 128], strides = [1, 1]} : vector<8x128xf32> to vector<1x128xf32>
    %111 = vector.broadcast %110 : vector<1x128xf32> to vector<2x128xf32>
    %112 = arith.mulf %109, %111 : vector<2x128xf32>
    %113 = arith.addf %107, %112 : vector<2x128xf32>
    %c7_53 = arith.constant 7 : index
    %c0_54 = arith.constant 0 : index
    %c0_55 = arith.constant 0 : index
    %114 = vector.load %arg5[%c7_53, %c0_54, %c0_55] : memref<8x2x128xf32, #tpu.memory_space<vmem>>, vector<1x2x128xf32>
    %115 = vector.shape_cast %114 : vector<1x2x128xf32> to vector<2x128xf32>
    %116 = vector.extract_strided_slice %0 {offsets = [7, 0], sizes = [1, 128], strides = [1, 1]} : vector<8x128xf32> to vector<1x128xf32>
    %117 = vector.broadcast %116 : vector<1x128xf32> to vector<2x128xf32>
    %118 = arith.mulf %115, %117 : vector<2x128xf32>
    %119 = arith.addf %113, %118 : vector<2x128xf32>
    %c0_56 = arith.constant 0 : index
    %c0_57 = arith.constant 0 : index
    %120 = vector.load %arg6[%c0_56, %c0_57] : memref<10x128xf32, #tpu.memory_space<vmem>>, vector<8x128xf32>
    tpu.vector_store %arg6[%c0_56, %c0_57], %72 {strides = array<i32>} : memref<10x128xf32, #tpu.memory_space<vmem>>, vector<8x128xf32>,
    %c8 = arith.constant 8 : index
    %c0_58 = arith.constant 0 : index
    %121 = vector.load %arg6[%c8, %c0_58] : memref<10x128xf32, #tpu.memory_space<vmem>>, vector<2x128xf32>
    tpu.vector_store %arg6[%c8, %c0_58], %119 {strides = array<i32>} : memref<10x128xf32, #tpu.memory_space<vmem>>, vector<2x128xf32>,
    return
  }
  func.func @transform_0(%arg0: i32) -> (i32, i32) {
    %c0_i32 = arith.constant 0 : i32
    %c0_i32_0 = arith.constant 0 : i32
    return %c0_i32, %arg0 : i32, i32
  }
  func.func @transform_1(%arg0: i32) -> (i32, i32) {
    %c0_i32 = arith.constant 0 : i32
    %c0_i32_0 = arith.constant 0 : i32
    return %c0_i32, %arg0 : i32, i32
  }
  func.func @transform_2(%arg0: i32) -> (i32, i32, i32) {
    %c0_i32 = arith.constant 0 : i32
    %c0_i32_0 = arith.constant 0 : i32
    %c0_i32_1 = arith.constant 0 : i32
    return %c0_i32, %c0_i32_0, %arg0 : i32, i32, i32
  }
  func.func @transform_3(%arg0: i32) -> (i32, i32, i32) {
    %c0_i32 = arith.constant 0 : i32
    %c0_i32_0 = arith.constant 0 : i32
    %c0_i32_1 = arith.constant 0 : i32
    return %c0_i32, %c0_i32_0, %arg0 : i32, i32, i32
  }
  func.func @transform_4(%arg0: i32) -> (i32, i32, i32) {
    %c0_i32 = arith.constant 0 : i32
    %c0_i32_0 = arith.constant 0 : i32
    %c0_i32_1 = arith.constant 0 : i32
    return %c0_i32, %c0_i32_0, %arg0 : i32, i32, i32
  }
  func.func @transform_5(%arg0: i32) -> (i32, i32) {
    %c0_i32 = arith.constant 0 : i32
    %c0_i32_0 = arith.constant 0 : i32
    return %c0_i32, %arg0 : i32, i32
  }
}

</mosaic_0001>

<llo_original>
// kernel: dynamical_system_var_forward.1
$region0: #{dynamical_system_var_forward.1}
  #allocation0 [shape = 'u32[]', space=smem, size = 0x4, offset = 0x4, fixed_abs, tag = 'smem constant byte address 0x4 - core index']
  #allocation1 [shape = 'u32[144,128]{1,0:T(1,128)}', space=vmem, size = 0x12000, scoped, tag = 'internal scratch']
  %s0 = inlined_call_operand.vmem [shape: f32[8,4], index: 0, kind: input, shape index: {}]
  %s1 = inlined_call_operand.vmem [shape: f32[4,4], index: 1, kind: input, shape index: {}]
  %s2 = inlined_call_operand.vmem [shape: f32[8,8,4], index: 2, kind: input, shape index: {}]
  %s3 = inlined_call_operand.vmem [shape: f32[4,8,4], index: 3, kind: input, shape index: {}]
  %s4 = inlined_call_operand.vmem [shape: f32[8,2,4], index: 4, kind: input, shape index: {}]
  %s5 = inlined_call_operand.vmem [shape: f32[10,4], index: 5, kind: output, shape index: {}]
  %s6 = sld [smem:[#allocation0]]
  $region30: #{dynamical_system_var_forward.1} parent=0
    _
  %s8 = ssub.s32 1, %s6
  %s9 = scalar_select 0, %s8, %s6
  // Predicated region
  $region2: #{dynamical_system_var_forward.1} parent=0 // pred_check
    _
  $region3: #{dynamical_system_var_forward.1} parent=0 // pred_check_branch
    %11 = sbr.rel (0) target = $region5
  $region4: #{dynamical_system_var_forward.1} parent=0 // pred_region
    _
  $region5: #{dynamical_system_var_forward.1} parent=0 // pred_fallthru
    _
  // Predicated region
  $region6: #{dynamical_system_var_forward.1} parent=0 // pred_check
    _
  $region7: #{dynamical_system_var_forward.1} parent=0 // pred_check_branch
    %13 = sbr.rel (0) target = $region9
  $region8: #{dynamical_system_var_forward.1} parent=0 // pred_region
    _
  $region9: #{dynamical_system_var_forward.1} parent=0 // pred_fallthru
    _
  // Predicated region
  $region10: #{dynamical_system_var_forward.1} parent=0 // pred_check
    _
  $region11: #{dynamical_system_var_forward.1} parent=0 // pred_check_branch
    %15 = sbr.rel (0) target = $region13
  $region12: #{dynamical_system_var_forward.1} parent=0 // pred_region
    _
  $region13: #{dynamical_system_var_forward.1} parent=0 // pred_fallthru
    _
  // Predicated region
  $region14: #{dynamical_system_var_forward.1} parent=0 // pred_check
    _
  $region15: #{dynamical_system_var_forward.1} parent=0 // pred_check_branch
    %17 = sbr.rel (0) target = $region17
  $region16: #{dynamical_system_var_forward.1} parent=0 // pred_region
    _
  $region17: #{dynamical_system_var_forward.1} parent=0 // pred_fallthru
    _
  // Predicated region
  $region18: #{dynamical_system_var_forward.1} parent=0 // pred_check
    _
  $region19: #{dynamical_system_var_forward.1} parent=0 // pred_check_branch
    %19 = sbr.rel (0) target = $region21
  $region20: #{dynamical_system_var_forward.1} parent=0 // pred_region
    _
  $region21: #{dynamical_system_var_forward.1} parent=0 // pred_fallthru
    _
  %v20 = vld [vmem:[%s0] sm:$0xff]
  %v21 = vld [vmem:[%s1] sm:$0xf]
  %v22 = vld [vmem:[%s2] sm:$0xff]
  %v23 = vlaneseq
  %v24 = vshrl.u32 %v23, 7
  %v25 = vsub.s32 0, %v24
  %v26 = vrot.slane %v20, %v25
  %v27 = vmul.f32 %v22, %v26
  %s28 = scalar_lea.vmem %s2, 8
  %v29 = vld [vmem:[%s28] sm:$0xff]
  %v30 = vlaneseq
  %v31 = vshrl.u32 %v30, 7
  %v32 = vsub.s32 1, %v31
  %v33 = vrot.slane %v20, %v32
  %v34 = vmul.f32 %v29, %v33
  %v35 = vadd.f32 %v27, %v34
  %s36 = scalar_lea.vmem %s2, 16
  %v37 = vld [vmem:[%s36] sm:$0xff]
  %v38 = vlaneseq
  %v39 = vshrl.u32 %v38, 7
  %v40 = vsub.s32 2, %v39
  %v41 = vrot.slane %v20, %v40
  %v42 = vmul.f32 %v37, %v41
  %v43 = vadd.f32 %v35, %v42
  %s44 = scalar_lea.vmem %s2, 24
  %v45 = vld [vmem:[%s44] sm:$0xff]
  %v46 = vlaneseq
  %v47 = vshrl.u32 %v46, 7
  %v48 = vsub.s32 3, %v47
  %v49 = vrot.slane %v20, %v48
  %v50 = vmul.f32 %v45, %v49
  %v51 = vadd.f32 %v43, %v50
  %s52 = scalar_lea.vmem %s2, 32
  %v53 = vld [vmem:[%s52] sm:$0xff]
  %v54 = vlaneseq
  %v55 = vshrl.u32 %v54, 7
  %v56 = vsub.s32 4, %v55
  %v57 = vrot.slane %v20, %v56
  %v58 = vmul.f32 %v53, %v57
  %v59 = vadd.f32 %v51, %v58
  %s60 = scalar_lea.vmem %s2, 40
  %v61 = vld [vmem:[%s60] sm:$0xff]
  %v62 = vlaneseq
  %v63 = vshrl.u32 %v62, 7
  %v64 = vsub.s32 5, %v63
  %v65 = vrot.slane %v20, %v64
  %v66 = vmul.f32 %v61, %v65
  %v67 = vadd.f32 %v59, %v66
  %s68 = scalar_lea.vmem %s2, 48
  %v69 = vld [vmem:[%s68] sm:$0xff]
  %v70 = vlaneseq
  %v71 = vshrl.u32 %v70, 7
  %v72 = vsub.s32 6, %v71
  %v73 = vrot.slane %v20, %v72
  %v74 = vmul.f32 %v69, %v73
  %v75 = vadd.f32 %v67, %v74
  %s76 = scalar_lea.vmem %s2, 56
  %v77 = vld [vmem:[%s76] sm:$0xff]
  %v78 = vlaneseq
  %v79 = vshrl.u32 %v78, 7
  %v80 = vsub.s32 7, %v79
  %v81 = vrot.slane %v20, %v80
  %v82 = vmul.f32 %v77, %v81
  %v83 = vadd.f32 %v75, %v82
  %v84 = vld [vmem:[%s3] sm:$0xff]
  %v85 = vlaneseq
  %v86 = vshrl.u32 %v85, 7
  %v87 = vsub.s32 0, %v86
  %v88 = vrot.slane %v21, %v87
  %v89 = vmul.f32 %v84, %v88
  %v90 = vadd.f32 %v83, %v89
  %s91 = scalar_lea.vmem %s3, 8
  %v92 = vld [vmem:[%s91] sm:$0xff]
  %v93 = vlaneseq
  %v94 = vshrl.u32 %v93, 7
  %v95 = vsub.s32 1, %v94
  %v96 = vrot.slane %v21, %v95
  %v97 = vmul.f32 %v92, %v96
  %v98 = vadd.f32 %v90, %v97
  %s99 = scalar_lea.vmem %s3, 16
  %v100 = vld [vmem:[%s99] sm:$0xff]
  %v101 = vlaneseq
  %v102 = vshrl.u32 %v101, 7
  %v103 = vsub.s32 2, %v102
  %v104 = vrot.slane %v21, %v103
  %v105 = vmul.f32 %v100, %v104
  %v106 = vadd.f32 %v98, %v105
  %s107 = scalar_lea.vmem %s3, 24
  %v108 = vld [vmem:[%s107] sm:$0xff]
  %v109 = vlaneseq
  %v110 = vshrl.u32 %v109, 7
  %v111 = vsub.s32 3, %v110
  %v112 = vrot.slane %v21, %v111
  %v113 = vmul.f32 %v108, %v112
  %v114 = vadd.f32 %v106, %v113
  %v115 = vld [vmem:[%s4] sm:$0x3]
  %v116 = vmul.f32 %v115, %v26
  %s117 = scalar_lea.vmem %s4, 2
  %v118 = vld [vmem:[%s117] sm:$0x3]
  %v119 = vmul.f32 %v118, %v33
  %v120 = vadd.f32 %v116, %v119
  %s121 = scalar_lea.vmem %s4, 4
  %v122 = vld [vmem:[%s121] sm:$0x3]
  %v123 = vmul.f32 %v122, %v41
  %v124 = vadd.f32 %v120, %v123
  %s125 = scalar_lea.vmem %s4, 6
  %v126 = vld [vmem:[%s125] sm:$0x3]
  %v127 = vmul.f32 %v126, %v49
  %v128 = vadd.f32 %v124, %v127
  %s129 = scalar_lea.vmem %s4, 8
  %v130 = vld [vmem:[%s129] sm:$0x3]
  %v131 = vmul.f32 %v130, %v57
  %v132 = vadd.f32 %v128, %v131
  %s133 = scalar_lea.vmem %s4, 10
  %v134 = vld [vmem:[%s133] sm:$0x3]
  %v135 = vmul.f32 %v134, %v65
  %v136 = vadd.f32 %v132, %v135
  %s137 = scalar_lea.vmem %s4, 12
  %v138 = vld [vmem:[%s137] sm:$0x3]
  %v139 = vmul.f32 %v138, %v73
  %v140 = vadd.f32 %v136, %v139
  %s141 = scalar_lea.vmem %s4, 14
  %v142 = vld [vmem:[%s141] sm:$0x3]
  %v143 = vmul.f32 %v142, %v81
  %v144 = vadd.f32 %v140, %v143
  %145 = vst [vmem:[%s5] sm:$0xff] %v114
  %146 = vst [vmem:[%s5 + $0x8] sm:$0x3] %v144
  // Predicated region
  $region22: #{dynamical_system_var_forward.1} parent=0 // pred_check
    _
  $region23: #{dynamical_system_var_forward.1} parent=0 // pred_check_branch
    %148 = sbr.rel (0) target = $region25
  $region24: #{dynamical_system_var_forward.1} parent=0 // pred_region
    _
  $region25: #{dynamical_system_var_forward.1} parent=0 // pred_fallthru
    _
  // Predicated region
  $region26: #{dynamical_system_var_forward.1} parent=0 // pred_check
    _
  $region27: #{dynamical_system_var_forward.1} parent=0 // pred_check_branch
    %150 = sbr.rel (0) target = $region29
  $region28: #{dynamical_system_var_forward.1} parent=0 // pred_region
    _
  $region29: #{dynamical_system_var_forward.1} parent=0 // pred_fallthru
    _

</llo_original>
